<compile_context>
chip_gen: v6e
topology: v6e:2x2x1
jax: 0.10.0
libtpu: 0.0.40
codegen_flags: <defaults>
</compile_context>

<pallas_src>
import jax
import jax.numpy as jnp
from jax import lax
from jax.experimental import pallas as pl
from jax.experimental.pallas import tpu as pltpu

# ---- "SHINEConfig" (small, synthetic) --------------------------------------
FEATURE_DIM = 8            # config.feature_dim
HIDDEN = 32                # config.geo_mlp_hidden_dim
MLP_LEVEL = 2              # config.geo_mlp_level (kernel hard-codes 2 layers)
MLP_BIAS_ON = True         # config.geo_mlp_bias_on
SEM_CLASS_COUNT = 3        # config.sem_class_count
NUM_CLASSES = SEM_CLASS_COUNT + 1
# use_pe / use_gaussian_pe = False  ->  input_layer_count = 2 * FEATURE_DIM
IN_DIM = 2 * FEATURE_DIM

CLS_PAD = 8                       # classes padded to a full sublane group
IN_PAD = FEATURE_DIM + CLS_PAD    # fused layer-0 input depth (16)
N_TILE = 512                      # lane-dense query tile (multiple of 128, >=256)

# Lane-aligned column layout of the packed weight operand wpack: [HIDDEN, 56]
_B1_COL = 0                       # b1 column               -> [H, 1]   @ lane 0
_WOUT_COL = 1                     # wout column             -> [H, 1]   @ lane 1
# lanes 2..7: zero pad
_WFUSED_OFF = 8                   # [W0_top.T | class_mat.T]-> [H, 16]  @ lanes 8..23
_W1_OFF = _WFUSED_OFF + IN_PAD    # W1.T                    -> [H, 32]  @ lanes 24..55
_PACK_COLS = _W1_OFF + HIDDEN     # = 56


def decoder_emb_kernel(feat_t_ref, lab_ref, wpack_ref, bout_ref, out_ref, xin_ref):
    wpack = wpack_ref[...]                                      # [H, 56] f32
    b1_col = wpack[:, _B1_COL:_B1_COL + 1]                      # [H, 1]
    wout_col = wpack[:, _WOUT_COL:_WOUT_COL + 1]                # [H, 1]
    wfused_t = wpack[:, _WFUSED_OFF:_WFUSED_OFF + IN_PAD]       # [H, 16]
    w1_t = wpack[:, _W1_OFF:_W1_OFF + HIDDEN]                   # [H, H]

    n_lanes = out_ref.shape[1]                                  # N_TILE
    lab_row = lab_ref[...]                                      # [1, N_TILE] int32

    # one-hot over padded classes on the sublane axis; N stays lane-dense.
    # TODO(synk): labels < 0 or >= NUM_CLASSES give a zero embedding here,
    # whereas torch nn.Embedding would raise.
    cls_iota = lax.broadcasted_iota(jnp.int32, (CLS_PAD, n_lanes), 0)
    onehot = (lab_row == cls_iota).astype(jnp.float32)          # [8, N_TILE]

    # assemble fused layer-0 input in VMEM scratch: [feat_t ; onehot]
    xin_ref[0:FEATURE_DIM, :] = feat_t_ref[...]                 # rows 0..7
    xin_ref[FEATURE_DIM:IN_PAD, :] = onehot                     # rows 8..15

    # --- layer 0: single fused matmul (emb table, W0_bottom, b0 pre-folded) --
    h = jnp.dot(wfused_t, xin_ref[...], preferred_element_type=jnp.float32)
    h = jnp.maximum(h, 0.0)                                     # [H, N_TILE]

    # --- layer 1 (mlp_level = 2) ---
    h = jnp.dot(w1_t, h, preferred_element_type=jnp.float32) + b1_col
    h = jnp.maximum(h, 0.0)                                     # [H, N_TILE]

    # --- output head: VPU multiply + sublane (XLU) reduce; bout from SMEM ----
    out_ref[...] = (jnp.sum(h * wout_col, axis=0, keepdims=True)
                    + bout_ref[0, 0])                           # [1, N_TILE]


def prepare_decoder_params(params):
    """One-time weight folding/packing (run when params change, NOT per call)."""
    assert MLP_LEVEL == 2, "kernel hard-codes geo_mlp_level == 2"
    assert MLP_BIAS_ON, "kernel hard-codes geo_mlp_bias_on == True"
    emb_tbl, w0, b0, w1, b1, wout, bout = params

    # fold embedding table + bottom half of W0 + b0 into a per-class matrix
    class_mat = emb_tbl @ w0[FEATURE_DIM:, :] + b0              # [C, H]
    class_mat_pad = jnp.concatenate(
        [class_mat, jnp.zeros((CLS_PAD - NUM_CLASSES, HIDDEN), jnp.float32)],
        axis=0)                                                 # [8, H]

    wpack = jnp.concatenate(
        [b1.reshape(HIDDEN, 1),                                 # col 0
         wout.reshape(HIDDEN, 1),                               # col 1
         jnp.zeros((HIDDEN, _WFUSED_OFF - 2), jnp.float32),     # cols 2..7 pad
         w0[:FEATURE_DIM, :].T,                                 # cols 8..15
         class_mat_pad.T,                                       # cols 16..23
         w1.T],                                                 # cols 24..55
        axis=1).astype(jnp.float32)                             # [H, 56]

    bout_arr = jnp.asarray(bout, jnp.float32).reshape(1, 1)     # SMEM scalar
    return wpack, bout_arr


def decoder_emb_forward(feature, labels, packed, *, n_tile=N_TILE):
    """feature: [N, F] f32, labels: [N] int, packed from prepare_decoder_params
    -> [N] f32 (sdf)."""
    wpack, bout_arr = packed
    n = feature.shape[0]
    n_pad = ((n + n_tile - 1) // n_tile) * n_tile

    # per-call layout plumbing only (weights already packed off the hot path)
    feat_t = feature.T.astype(jnp.float32)                      # [F, N]
    lab_row = labels.reshape(1, n).astype(jnp.int32)            # [1, N]
    if n_pad != n:
        feat_t = jnp.pad(feat_t, ((0, 0), (0, n_pad - n)))
        lab_row = jnp.pad(lab_row, ((0, 0), (0, n_pad - n)))

    out_row = pl.pallas_call(
        decoder_emb_kernel,
        out_shape=jax.ShapeDtypeStruct((1, n_pad), jnp.float32),
        grid=(n_pad // n_tile,),
        in_specs=[
            pl.BlockSpec((FEATURE_DIM, n_tile), lambda i: (0, i)),   # feat_t
            pl.BlockSpec((1, n_tile), lambda i: (0, i)),             # labels row
            pl.BlockSpec((HIDDEN, _PACK_COLS), lambda i: (0, 0)),    # weights (resident)
            pl.BlockSpec(memory_space=pltpu.MemorySpace.SMEM),       # bout scalar
        ],
        out_specs=pl.BlockSpec((1, n_tile), lambda i: (0, i)),
        scratch_shapes=[pltpu.VMEM((IN_PAD, n_tile), jnp.float32)],  # fused xin
        compiler_params=pltpu.CompilerParams(
            dimension_semantics=("parallel",)),                      # v7x: both TCs
    )(feat_t, lab_row, wpack, bout_arr)

    return out_row[0, :n]                                            # [N]


def init_params(key):
    ks = jax.random.split(key, 7)
    emb_tbl = jax.random.normal(ks[0], (NUM_CLASSES, FEATURE_DIM), jnp.float32)
    w0 = jax.random.normal(ks[1], (IN_DIM, HIDDEN), jnp.float32) * 0.1
    b0 = jax.random.normal(ks[2], (1, HIDDEN), jnp.float32) * 0.1
    w1 = jax.random.normal(ks[3], (HIDDEN, HIDDEN), jnp.float32) * 0.1
    b1 = jax.random.normal(ks[4], (1, HIDDEN), jnp.float32) * 0.1
    wout = jax.random.normal(ks[5], (HIDDEN, 1), jnp.float32) * 0.1
    bout = jax.random.normal(ks[6], (1, 1), jnp.float32) * 0.1
    return (emb_tbl, w0, b0, w1, b1, wout, bout)


def reference_forward(feature, labels, params):
    emb_tbl, w0, b0, w1, b1, wout, bout = params
    sl_emb = jnp.take(emb_tbl, labels, axis=0)
    x = jnp.concatenate([feature, sl_emb], axis=1)
    h = jax.nn.relu(x @ w0 + b0)
    h = jax.nn.relu(h @ w1 + b1)
    return (h @ wout + bout)[:, 0]


if __name__ == "__main__":
    key = jax.random.PRNGKey(0)
    k_feat, k_lab, k_param = jax.random.split(key, 3)

    N = 1024   # batched queries: amortizes launch/DMA overhead over the grid
    feature = jax.random.normal(k_feat, (N, FEATURE_DIM), jnp.float32)
    labels = jax.random.randint(k_lab, (N,), 0, NUM_CLASSES, jnp.int32)
    params = init_params(k_param)

    packed = prepare_decoder_params(params)   # one-time prep, off the hot path
    packed = jax.block_until_ready(packed)

    out = decoder_emb_forward(feature, labels, packed)
    out = jax.block_until_ready(out)

    ref = reference_forward(feature, labels, params)
    assert out.shape == (N,)
    assert jnp.allclose(out, ref, atol=1e-4, rtol=1e-4), (out, ref)
    print("KERNEL_OK")
</pallas_src>

<mosaic_0001>
module attributes {stable_mosaic.version = 11 : i64} {
  func.func @decoder_emb_kernel(%arg0: i32, %arg1: memref<8x512xf32, #tpu.memory_space<vmem>>, %arg2: memref<1x512xi32, #tpu.memory_space<vmem>>, %arg3: memref<32x56xf32, #tpu.memory_space<vmem>>, %arg4: memref<1x1xf32, #tpu.memory_space<smem>>, %arg5: memref<1x512xf32, #tpu.memory_space<vmem>>, %arg6: memref<16x512xf32, #tpu.memory_space<vmem>>) attributes {dimension_semantics = [#tpu.dimension_semantics<parallel>], iteration_bounds = array<i64: 2>, scalar_prefetch = 0 : i64, scratch_operands = 1 : i64, tpu.core_type = #tpu.core_type<tc>, window_params = [{transform_indices = @transform_0, window_bounds = array<i64: 8, 512>}, {transform_indices = @transform_1, window_bounds = array<i64: 1, 512>}, {pipeline_mode = #tpu.pipeline_mode<synchronous>, transform_indices = @transform_2, window_bounds = array<i64: 32, 56>}, {transform_indices = @transform_3, window_bounds = array<i64: 1, 1>}, {transform_indices = @transform_4, window_bounds = array<i64: 1, 512>}]} {
    %c0 = arith.constant 0 : index
    %c0_0 = arith.constant 0 : index
    %0 = vector.load %arg3[%c0, %c0_0] : memref<32x56xf32, #tpu.memory_space<vmem>>, vector<32x56xf32>
    %1 = vector.extract_strided_slice %0 {offsets = [0, 0], sizes = [32, 1], strides = [1, 1]} : vector<32x56xf32> to vector<32x1xf32>
    %2 = vector.extract_strided_slice %0 {offsets = [0, 1], sizes = [32, 1], strides = [1, 1]} : vector<32x56xf32> to vector<32x1xf32>
    %3 = vector.extract_strided_slice %0 {offsets = [0, 8], sizes = [32, 16], strides = [1, 1]} : vector<32x56xf32> to vector<32x16xf32>
    %4 = vector.extract_strided_slice %0 {offsets = [0, 24], sizes = [32, 32], strides = [1, 1]} : vector<32x56xf32> to vector<32x32xf32>
    %c0_1 = arith.constant 0 : index
    %c0_2 = arith.constant 0 : index
    %5 = vector.load %arg2[%c0_1, %c0_2] : memref<1x512xi32, #tpu.memory_space<vmem>>, vector<1x512xi32>
    %6 = tpu.iota {dimensions = array<i32: 0>} : vector<8x512xi32>
    %7 = vector.broadcast %5 : vector<1x512xi32> to vector<8x512xi32>
    %8 = arith.cmpi eq, %7, %6 : vector<8x512xi32>
    %9 = arith.extui %8 : vector<8x512xi1> to vector<8x512xi32>
    %10 = arith.sitofp %9 : vector<8x512xi32> to vector<8x512xf32>
    %c0_3 = arith.constant 0 : index
    %c0_4 = arith.constant 0 : index
    %11 = vector.load %arg1[%c0_3, %c0_4] : memref<8x512xf32, #tpu.memory_space<vmem>>, vector<8x512xf32>
    %c0_5 = arith.constant 0 : index
    %c0_6 = arith.constant 0 : index
    %12 = vector.load %arg6[%c0_5, %c0_6] : memref<16x512xf32, #tpu.memory_space<vmem>>, vector<8x512xf32>
    tpu.vector_store %arg6[%c0_5, %c0_6], %11 {strides = array<i32>} : memref<16x512xf32, #tpu.memory_space<vmem>>, vector<8x512xf32>,
    %c8 = arith.constant 8 : index
    %c0_7 = arith.constant 0 : index
    %13 = vector.load %arg6[%c8, %c0_7] : memref<16x512xf32, #tpu.memory_space<vmem>>, vector<8x512xf32>
    tpu.vector_store %arg6[%c8, %c0_7], %10 {strides = array<i32>} : memref<16x512xf32, #tpu.memory_space<vmem>>, vector<8x512xf32>,
    %c0_8 = arith.constant 0 : index
    %c0_9 = arith.constant 0 : index
    %14 = vector.load %arg6[%c0_8, %c0_9] : memref<16x512xf32, #tpu.memory_space<vmem>>, vector<16x512xf32>
    %cst = arith.constant dense<0.000000e+00> : vector<32x512xf32>
    %15 = tpu.matmul %3, %14, %cst {dimension_numbers = #tpu.dot_dimension_numbers<[1], [0], [0], [1], [0, 0, 1, 1], [], []>} : vector<32x16xf32>, vector<16x512xf32>, vector<32x512xf32> -> vector<32x512xf32>
    %cst_10 = arith.constant 0.000000e+00 : f32
    %16 = vector.broadcast %cst_10 : f32 to vector<32x512xf32>
    %17 = arith.maximumf %15, %16 : vector<32x512xf32>
    %cst_11 = arith.constant dense<0.000000e+00> : vector<32x512xf32>
    %18 = tpu.matmul %4, %17, %cst_11 {dimension_numbers = #tpu.dot_dimension_numbers<[1], [0], [0], [1], [0, 0, 1, 1], [], []>} : vector<32x32xf32>, vector<32x512xf32>, vector<32x512xf32> -> vector<32x512xf32>
    %19 = vector.broadcast %1 : vector<32x1xf32> to vector<32x512xf32>
    %20 = arith.addf %18, %19 : vector<32x512xf32>
    %cst_12 = arith.constant 0.000000e+00 : f32
    %21 = vector.broadcast %cst_12 : f32 to vector<32x512xf32>
    %22 = arith.maximumf %20, %21 : vector<32x512xf32>
    %23 = vector.broadcast %2 : vector<32x1xf32> to vector<32x512xf32>
    %24 = arith.mulf %22, %23 : vector<32x512xf32>
    %cst_13 = arith.constant dense<0.000000e+00> : vector<512xf32>
    %25 = vector.multi_reduction <add>, %24, %cst_13 [0] : vector<32x512xf32> to vector<512xf32>
    %26 = vector.shape_cast %25 : vector<512xf32> to vector<1x512xf32>
    %c0_14 = arith.constant 0 : index
    %c0_15 = arith.constant 0 : index
    %27 = memref.load %arg4[%c0_14, %c0_15] : memref<1x1xf32, #tpu.memory_space<smem>>
    %28 = vector.broadcast %27 : f32 to vector<1x512xf32>
    %29 = arith.addf %26, %28 : vector<1x512xf32>
    %c0_16 = arith.constant 0 : index
    %c0_17 = arith.constant 0 : index
    %30 = vector.load %arg5[%c0_16, %c0_17] : memref<1x512xf32, #tpu.memory_space<vmem>>, vector<1x512xf32>
    tpu.vector_store %arg5[%c0_16, %c0_17], %29 {strides = array<i32>} : memref<1x512xf32, #tpu.memory_space<vmem>>, vector<1x512xf32>,
    return
  }
  func.func @transform_0(%arg0: i32) -> (i32, i32) {
    %c0_i32 = arith.constant 0 : i32
    %c0_i32_0 = arith.constant 0 : i32
    return %c0_i32, %arg0 : i32, i32
  }
  func.func @transform_1(%arg0: i32) -> (i32, i32) {
    %c0_i32 = arith.constant 0 : i32
    %c0_i32_0 = arith.constant 0 : i32
    return %c0_i32, %arg0 : i32, i32
  }
  func.func @transform_2(%arg0: i32) -> (i32, i32) {
    %c0_i32 = arith.constant 0 : i32
    %c0_i32_0 = arith.constant 0 : i32
    %c0_i32_1 = arith.constant 0 : i32
    return %c0_i32, %c0_i32_0 : i32, i32
  }
  func.func @transform_3(%arg0: i32) -> (i32, i32) {
    %c0_i32 = arith.constant 0 : i32
    %c0_i32_0 = arith.constant 0 : i32
    %c0_i32_1 = arith.constant 0 : i32
    return %c0_i32, %c0_i32_0 : i32, i32
  }
  func.func @transform_4(%arg0: i32) -> (i32, i32) {
    %c0_i32 = arith.constant 0 : i32
    %c0_i32_0 = arith.constant 0 : i32
    return %c0_i32, %arg0 : i32, i32
  }
}

</mosaic_0001>

<llo_original>
// kernel: tpu_custom_call.1
$region0: #{tpu_custom_call.1}
  #allocation0 [shape = 'u32[]', space=smem, size = 0x4, offset = 0x4, fixed_abs, tag = 'smem constant byte address 0x4 - core index']
  #allocation1 [shape = 'u32[144,128]{1,0:T(1,128)}', space=vmem, size = 0x12000, scoped, tag = 'internal scratch']
  #allocation2 [shape = 'f32[16,512]{1,0:T(8,128)}', space=vmem, size = 0x8000, scoped, tag = 'scratch operand']
  #allocation3 [shape = 'f32[1,1]{1,0:T(1,128)S(6)}', space=smem, size = 0x200, scoped, tag = 'scoped memory for tpu_custom_call.1']
  %s0 = inlined_call_operand.hbm [shape: f32[8,1024], index: 0, kind: input, shape index: {}]
  %s1 = inlined_call_operand.hbm [shape: s32[1,1024], index: 1, kind: input, shape index: {}]
  %s2 = inlined_call_operand.hbm [shape: f32[32,56], index: 2, kind: input, shape index: {}]
  %s3 = inlined_call_operand.<no memory space> [shape: f32[1,1], index: 3, kind: input, shape index: {}]
  %s4 = inlined_call_operand.hbm [shape: f32[1,1024], index: 4, kind: output, shape index: {}]
  %s5 = sld [smem:[#allocation0]]
  $region61: #{tpu_custom_call.1} parent=0
    _
  %s7 = ssub.s32 1, %s5
  %s8 = scalar_select 0, %s7, %s5
  %9 = sst [smem:[#allocation3]] %s3
  $region1: #{tpu_custom_call.1} parent=0
    #allocation4 [shape = 'u8[32768]{0}', space=vmem, size = 0x8000, scoped, tag = 'input window, operand 0']
    #allocation5 [shape = 's32[2]{0}', space=sflag, size = 0x8, scoped, tag = 'scoped memory for tpu_custom_call.1']
    #allocation6 [shape = 's32[2]{0}', space=sflag, size = 0x8, scoped, tag = 'scoped memory for tpu_custom_call.1']
    #allocation7 [shape = 'u8[4096]{0}', space=vmem, size = 0x1000, scoped, tag = 'input window, operand 1']
    #allocation8 [shape = 's32[2]{0}', space=sflag, size = 0x8, scoped, tag = 'scoped memory for tpu_custom_call.1']
    #allocation9 [shape = 'u8[16384]{0}', space=vmem, size = 0x4000, scoped, tag = 'input window, operand 2, single buffered']
    #allocation10 [shape = 'u8[4096]{0}', space=vmem, size = 0x1000, scoped, tag = 'output window, operand 0']
    %10 = vsyncpa [#allocation5], 0
    %s11 = scalar_lea.sflag [#allocation5], 1
    %12 = vsyncpa %s11, 0
    %13 = vsyncpa [#allocation8], 0
    %s14 = scalar_lea.sflag [#allocation8], 1
    %15 = vsyncpa %s14, 0
    %16 = vsyncpa [#allocation6], 0
    %s17 = scalar_lea.sflag [#allocation6], 1
    %18 = vsyncpa %s17, 0
    loop: start=0, step=1, limit=4
    $region2: #{tpu_custom_call.1} parent=1 // loop_pre_header
      _
    $region3: #{tpu_custom_call.1} parent=1 // loop_header
      %s20 = sphi 0, %s24
      %p21 = scmp.ge.s32.totalorder %s20, 4
      %s30 = sphi 0, %s32
      %s33 = sphi 0, %s30
      %s34 = sphi 0, %s33
      %s50 = sphi 0, %s34
      %s56 = sphi 0, %s58
      %s59 = sphi 0, %s56
      %s60 = sphi 0, %s59
      %s76 = sphi 0, %s60
      %s80 = sphi 0, %s80
      %s82 = sphi 0, %s80
      %s83 = sphi 0, %s82
      %s97 = sphi 0, %s83
      %s101 = sphi 0, %s101
      %s103 = sphi 0, %s101
      %s104 = sphi 0, %s103
      %s118 = sphi 0, %s104
      %s124 = sphi 0, %s126
      %s127 = sphi 0, %s124
      %s128 = sphi 0, %s127
      %s144 = sphi 0, %s128
    $region4: #{tpu_custom_call.1} parent=1 // loop_header_branch
      %23 = sbr.rel (%p21) target = $region8
    $region5: #{tpu_custom_call.1} parent=1 // loop_body
      %s25 = ssub.s32 %s20, 1
      %s26 = ssub.s32 %s20, 2
      %s27 = sadd.s32 %s20, 1
      %s28 = ssub.s32 %s20, %s27
      %p29 = scmp.eq.s32.totalorder %s28, 0
      %s31 = sadd.s32 %s30, 1
      %s32 = scalar_select %p29, %s30, %s31
      %p35 = pneg %p29
      %p36 = scmp.eq.s32.totalorder %s20, 1
      %p37 = por %p35, %p36
      %p38 = scmp.ne.s32.totalorder %s30, %s33
      %p39 = scmp.eq.s32.totalorder %s20, 0
      %p40 = por %p38, %p39
      %p41 = scmp.ne.s32.totalorder %s30, %s33
      %p42 = scmp.eq.s32.totalorder %s25, 1
      %p43 = por %p41, %p42
      %p44 = scmp.ne.s32.totalorder %s33, %s34
      %p45 = scmp.eq.s32.totalorder %s25, 0
      %p46 = por %p44, %p45
      %p47 = scmp.ne.s32.totalorder %s33, %s34
      %p48 = scmp.eq.s32.totalorder %s26, 1
      %p49 = por %p47, %p48
      %p51 = scmp.ne.s32.totalorder %s34, %s50
      %p52 = scmp.eq.s32.totalorder %s26, 0
      %p53 = por %p51, %p52
      %s54 = ssub.s32 %s20, %s27
      %p55 = scmp.eq.s32.totalorder %s54, 0
      %s57 = sadd.s32 %s56, 1
      %s58 = scalar_select %p55, %s56, %s57
      %p61 = pneg %p55
      %p62 = scmp.eq.s32.totalorder %s20, 1
      %p63 = por %p61, %p62
      %p64 = scmp.ne.s32.totalorder %s56, %s59
      %p65 = scmp.eq.s32.totalorder %s20, 0
      %p66 = por %p64, %p65
      %p67 = scmp.ne.s32.totalorder %s56, %s59
      %p68 = scmp.eq.s32.totalorder %s25, 1
      %p69 = por %p67, %p68
      %p70 = scmp.ne.s32.totalorder %s59, %s60
      %p71 = scmp.eq.s32.totalorder %s25, 0
      %p72 = por %p70, %p71
      %p73 = scmp.ne.s32.totalorder %s59, %s60
      %p74 = scmp.eq.s32.totalorder %s26, 1
      %p75 = por %p73, %p74
      %p77 = scmp.ne.s32.totalorder %s60, %s76
      %p78 = scmp.eq.s32.totalorder %s26, 0
      %p79 = por %p77, %p78
      %s81 = sadd.s32 %s80, 1
      %p84 = scmp.eq.s32.totalorder %s20, 1
      %p85 = scmp.ne.s32.totalorder %s80, %s82
      %p86 = scmp.eq.s32.totalorder %s20, 0
      %p87 = por %p85, %p86
      %p88 = scmp.ne.s32.totalorder %s80, %s82
      %p89 = scmp.eq.s32.totalorder %s25, 1
      %p90 = por %p88, %p89
      %p91 = scmp.ne.s32.totalorder %s82, %s83
      %p92 = scmp.eq.s32.totalorder %s25, 0
      %p93 = por %p91, %p92
      %p94 = scmp.ne.s32.totalorder %s82, %s83
      %p95 = scmp.eq.s32.totalorder %s26, 1
      %p96 = por %p94, %p95
      %p98 = scmp.ne.s32.totalorder %s83, %s97
      %p99 = scmp.eq.s32.totalorder %s26, 0
      %p100 = por %p98, %p99
      %s102 = sadd.s32 %s101, 1
      %p105 = scmp.eq.s32.totalorder %s20, 1
      %p106 = scmp.ne.s32.totalorder %s101, %s103
      %p107 = scmp.eq.s32.totalorder %s20, 0
      %p108 = por %p106, %p107
      %p109 = scmp.ne.s32.totalorder %s101, %s103
      %p110 = scmp.eq.s32.totalorder %s25, 1
      %p111 = por %p109, %p110
      %p112 = scmp.ne.s32.totalorder %s103, %s104
      %p113 = scmp.eq.s32.totalorder %s25, 0
      %p114 = por %p112, %p113
      %p115 = scmp.ne.s32.totalorder %s103, %s104
      %p116 = scmp.eq.s32.totalorder %s26, 1
      %p117 = por %p115, %p116
      %p119 = scmp.ne.s32.totalorder %s104, %s118
      %p120 = scmp.eq.s32.totalorder %s26, 0
      %p121 = por %p119, %p120
      %s122 = ssub.s32 %s20, %s27
      %p123 = scmp.eq.s32.totalorder %s122, 0
      %s125 = sadd.s32 %s124, 1
      %s126 = scalar_select %p123, %s124, %s125
      %p129 = pneg %p123
      %p130 = scmp.eq.s32.totalorder %s20, 1
      %p131 = por %p129, %p130
      %p132 = scmp.ne.s32.totalorder %s124, %s127
      %p133 = scmp.eq.s32.totalorder %s20, 0
      %p134 = por %p132, %p133
      %p135 = scmp.ne.s32.totalorder %s124, %s127
      %p136 = scmp.eq.s32.totalorder %s25, 1
      %p137 = por %p135, %p136
      %p138 = scmp.ne.s32.totalorder %s127, %s128
      %p139 = scmp.eq.s32.totalorder %s25, 0
      %p140 = por %p138, %p139
      %p141 = scmp.ne.s32.totalorder %s127, %s128
      %p142 = scmp.eq.s32.totalorder %s26, 1
      %p143 = por %p141, %p142
      %p145 = scmp.ne.s32.totalorder %s128, %s144
      %p146 = scmp.eq.s32.totalorder %s26, 0
      %p147 = por %p145, %p146
      %p148 = scmp.le.s32.totalorder 1, %s20
      %p149 = scmp.lt.s32.totalorder %s20, 3
      %p150 = pnand %p148, %p149
      %p151 = pneg %p150
      // Predicated region
      $region9: #{tpu_custom_call.1} parent=5 // pred_check
        _
      $region10: #{tpu_custom_call.1} parent=5 // pred_check_branch
        %153 = sbr.rel (%p150) target = $region12
      $region11: #{tpu_custom_call.1} parent=5 // pred_region
        %s154 = ssub.s32 %s20, 1
        // Predicated region
        $region13: #{tpu_custom_call.1} parent=11 // pred_check
          %p155 = pneg %p93
        $region14: #{tpu_custom_call.1} parent=11 // pred_check_branch
          %157 = sbr.rel (%p155) target = $region16
        $region15: #{tpu_custom_call.1} parent=11 // pred_region
          %s159 = ssub.s32 512, 512
          %160 = vsyncadd [#allocation8], %s159
          %s161 = sshll.u32 [#allocation9], 4
          %s162 = int_to_ptr.vmem [resolvable:$true] %s161
          %167 = dma.hbm_to_vmem [thread:$0]  %s2, 512, %s162, [#allocation8], 128, 128, 8
        $region16: #{tpu_custom_call.1} parent=11 // pred_fallthru
          _
        // Predicated region
        $region17: #{tpu_custom_call.1} parent=11 // pred_check
          %p168 = pneg %p114
        $region18: #{tpu_custom_call.1} parent=11 // pred_check_branch
          %170 = sbr.rel (%p168) target = $region20
        $region19: #{tpu_custom_call.1} parent=11 // pred_region
          _
        $region20: #{tpu_custom_call.1} parent=11 // pred_fallthru
          _
      $region12: #{tpu_custom_call.1} parent=5 // pred_fallthru
        _
      %p171 = scmp.lt.s32.totalorder %s20, 2
      // Predicated region
      $region21: #{tpu_custom_call.1} parent=5 // pred_check
        %p172 = pneg %p171
      $region22: #{tpu_custom_call.1} parent=5 // pred_check_branch
        %174 = sbr.rel (%p172) target = $region24
      $region23: #{tpu_custom_call.1} parent=5 // pred_region
        // Predicated region
        $region25: #{tpu_custom_call.1} parent=23 // pred_check
          %p175 = pneg %p40
        $region26: #{tpu_custom_call.1} parent=23 // pred_check_branch
          %177 = sbr.rel (%p175) target = $region28
        $region27: #{tpu_custom_call.1} parent=23 // pred_region
          %s178 = sand.u32 %s30, 1
          %s179 = scalar_lea.sflag [#allocation5], %s178
          %s180 = sand.u32 %s30, 1
          %s181 = smul.addr %s180, 32
          %s182 = scalar_lea.vmem [#allocation4], %s181
          %s183 = smul.u32 4, %s20
          %s185 = ssub.s32 512, 512
          %186 = vsyncadd %s179, %s185
          %s187 = smul.addr %s183, 128
          %s188 = scalar_lea.hbm %s0, %s187
          %s190 = sshll.u32 %s182, 4
          %s191 = int_to_ptr.vmem [resolvable:$true] %s190
          %193 = dma.hbm_to_vmem [thread:$0]  %s188, 512, %s191, %s179
        $region28: #{tpu_custom_call.1} parent=23 // pred_fallthru
          _
        // Predicated region
        $region29: #{tpu_custom_call.1} parent=23 // pred_check
          %p194 = pneg %p66
        $region30: #{tpu_custom_call.1} parent=23 // pred_check_branch
          %196 = sbr.rel (%p194) target = $region32
        $region31: #{tpu_custom_call.1} parent=23 // pred_region
          %s197 = sand.u32 %s20, 1
          %s198 = scalar_lea.sflag [#allocation8], %s197
          %s199 = sand.u32 %s56, 1
          %s200 = smul.addr %s199, 4
          %s201 = scalar_lea.vmem [#allocation7], %s200
          %s202 = smul.u32 4, %s20
          %s204 = ssub.s32 64, 64
          %205 = vsyncadd %s198, %s204
          %s206 = smul.addr %s202, 16
          %s207 = scalar_lea.hbm %s1, %s206
          %s209 = sshll.u32 %s201, 4
          %s210 = int_to_ptr.vmem [resolvable:$true] %s209
          %212 = dma.hbm_to_vmem [thread:$0]  %s207, 64, %s210, %s198
        $region32: #{tpu_custom_call.1} parent=23 // pred_fallthru
          _
      $region24: #{tpu_custom_call.1} parent=5 // pred_fallthru
        _
      %p213 = scmp.le.s32.totalorder 1, %s20
      %p214 = scmp.lt.s32.totalorder %s20, 3
      %p215 = pnand %p213, %p214
      %p216 = pneg %p215
      // Predicated region
      $region33: #{tpu_custom_call.1} parent=5 // pred_check
        _
      $region34: #{tpu_custom_call.1} parent=5 // pred_check_branch
        %218 = sbr.rel (%p215) target = $region36
      $region35: #{tpu_custom_call.1} parent=5 // pred_region
        %s219 = ssub.s32 %s20, 1
        %s220 = sand.u32 %s33, 1
        %s221 = scalar_lea.sflag [#allocation5], %s220
        %s222 = sand.u32 %s33, 1
        %s223 = smul.addr %s222, 32
        %s224 = scalar_lea.vmem [#allocation4], %s223
        // Predicated region
        $region37: #{tpu_custom_call.1} parent=35 // pred_check
          %p225 = pneg %p46
        $region38: #{tpu_custom_call.1} parent=35 // pred_check_branch
          %227 = sbr.rel (%p225) target = $region40
        $region39: #{tpu_custom_call.1} parent=35 // pred_region
          %228 = dma.done %s221, 512
        $region40: #{tpu_custom_call.1} parent=35 // pred_fallthru
          _
        %s229 = sand.u32 %s25, 1
        %s230 = scalar_lea.sflag [#allocation8], %s229
        %s231 = sand.u32 %s59, 1
        %s232 = smul.addr %s231, 4
        %s233 = scalar_lea.vmem [#allocation7], %s232
        // Predicated region
        $region41: #{tpu_custom_call.1} parent=35 // pred_check
          %p234 = pneg %p72
        $region42: #{tpu_custom_call.1} parent=35 // pred_check_branch
          %236 = sbr.rel (%p234) target = $region44
        $region43: #{tpu_custom_call.1} parent=35 // pred_region
          %237 = dma.done %s230, 64
        $region44: #{tpu_custom_call.1} parent=35 // pred_fallthru
          _
        // Predicated region
        $region45: #{tpu_custom_call.1} parent=35 // pred_check
          %p238 = pneg %p93
        $region46: #{tpu_custom_call.1} parent=35 // pred_check_branch
          %240 = sbr.rel (%p238) target = $region48
        $region47: #{tpu_custom_call.1} parent=35 // pred_region
          %241 = dma.done [#allocation8], 512
        $region48: #{tpu_custom_call.1} parent=35 // pred_fallthru
          _
        %s242 = sand.u32 %s33, 1
        %s243 = scalar_lea.sflag [#allocation5], %s242
        %s244 = sand.u32 %s33, 1
        %s245 = smul.addr %s244, 32
        %s246 = scalar_lea.vmem [#allocation4], %s245
        %p247 = pneg %p46
        %p248 = pneg %p43
        %s249 = sand.u32 %s25, 1
        %s250 = scalar_lea.sflag [#allocation8], %s249
        %s251 = sand.u32 %s59, 1
        %s252 = smul.addr %s251, 4
        %s253 = scalar_lea.vmem [#allocation7], %s252
        %p254 = pneg %p72
        %p255 = pneg %p69
        %p256 = pneg %p93
        %p257 = pneg %p90
        %p258 = pneg %p114
        %p259 = pneg %p111
        %p260 = pneg %p140
        %p261 = pneg %p137
        %s262 = sand.u32 %s127, 1
        %s263 = scalar_lea.sflag [#allocation6], %s262
        %s264 = sand.u32 %s127, 1
        %s265 = smul.addr %s264, 4
        %s266 = scalar_lea.vmem [#allocation10], %s265
        %s267 = smul.u32 4, %s25
        %s268 = smul.u32 4, %s25
        %s269 = smul.u32 4, %s25
        %v270 = vld [vmem:[#allocation9] sm:$0xff]
        %v271 = vld [vmem:[#allocation9 + $0x8] sm:$0xff]
        %v272 = vld [vmem:[#allocation9 + $0x10] sm:$0xff]
        %v273 = vld [vmem:[#allocation9 + $0x18] sm:$0xff]
        %v274 = vld [vmem:[%s233] sm:$0xf]
        %v275 = vlaneseq
        %v276 = vshrl.u32 %v275, 7
        %v277 = vlaneseq
        %v278 = vshrl.u32 %v277, 7
        %v279 = vsub.s32 0, %v278
        %v280 = vrot.slane %v274, %v279
        %v281 = vlaneseq
        %v282 = vshrl.u32 %v281, 7
        %v283 = vsub.s32 1, %v282
        %v284 = vrot.slane %v274, %v283
        %v285 = vlaneseq
        %v286 = vshrl.u32 %v285, 7
        %v287 = vsub.s32 2, %v286
        %v288 = vrot.slane %v274, %v287
        %v289 = vlaneseq
        %v290 = vshrl.u32 %v289, 7
        %v291 = vsub.s32 3, %v290
        %v292 = vrot.slane %v274, %v291
        %vm293 = vcmp.eq.s32.totalorder %v280, %v276
        %vm294 = vcmp.eq.s32.totalorder %v284, %v276
        %vm295 = vcmp.eq.s32.totalorder %v288, %v276
        %vm296 = vcmp.eq.s32.totalorder %v292, %v276
        %v297 = vsel %vm293, 1, 0
        %v298 = vsel %vm294, 1, 0
        %v299 = vsel %vm295, 1, 0
        %v300 = vsel %vm296, 1, 0
        %v301 = vcvt.s32.f32 %v297
        %v302 = vcvt.s32.f32 %v298
        %v303 = vcvt.s32.f32 %v299
        %v304 = vcvt.s32.f32 %v300
        %v305 = vld [vmem:[%s224] sm:$0xff]
        %v306 = vld [vmem:[%s224 + $0x8] sm:$0xff]
        %v307 = vld [vmem:[%s224 + $0x10] sm:$0xff]
        %v308 = vld [vmem:[%s224 + $0x18] sm:$0xff]
        %309 = vst [vmem:[#allocation2] sm:$0xff] %v305
        %310 = vst [vmem:[#allocation2 + $0x8] sm:$0xff] %v306
        %311 = vst [vmem:[#allocation2 + $0x10] sm:$0xff] %v307
        %312 = vst [vmem:[#allocation2 + $0x18] sm:$0xff] %v308
        %313 = vst [vmem:[#allocation2 + $0x20] sm:$0xff] %v301
        %314 = vst [vmem:[#allocation2 + $0x28] sm:$0xff] %v302
        %315 = vst [vmem:[#allocation2 + $0x30] sm:$0xff] %v303
        %316 = vst [vmem:[#allocation2 + $0x38] sm:$0xff] %v304
        %v317 = vld [vmem:[#allocation2] sm:$0xff]
        %v318 = vld [vmem:[#allocation2 + $0x8] sm:$0xff]
        %v319 = vld [vmem:[#allocation2 + $0x10] sm:$0xff]
        %v320 = vld [vmem:[#allocation2 + $0x18] sm:$0xff]
        %v321 = vld [vmem:[#allocation2 + $0x20] sm:$0xff]
        %v322 = vld [vmem:[#allocation2 + $0x28] sm:$0xff]
        %v323 = vld [vmem:[#allocation2 + $0x30] sm:$0xff]
        %v324 = vld [vmem:[#allocation2 + $0x38] sm:$0xff]
        %329 = vrot.lane.b32.xlu0 %v270, 120
        %v330 = vpop.permute.xlu0 %329
        %331 = vrot.lane.b32.xlu0 %v271, 120
        %v332 = vpop.permute.xlu0 %331
        %333 = vrot.lane.b32.xlu0 %v272, 120
        %v334 = vpop.permute.xlu0 %333
        %335 = vrot.lane.b32.xlu0 %v273, 120
        %v336 = vpop.permute.xlu0 %335
        %vm337 = vcmask 130048
        %v338 = vsel %vm337, %v330, 0
        %v340 = vsel %vm337, %v332, 0
        %v342 = vsel %vm337, %v334, 0
        %v344 = vsel %vm337, %v336, 0
        %346 = vmatprep.subr.mxu0 0.0
        %347 = vmatpush1.msra.mxu0 0.0
        %348 = vmatprep.subr.mxu0 0.0
        %349 = vmatpush1.msra.mxu0 0.0
        %350 = vmatprep.subr.mxu0 0.0
        %351 = vmatpush1.msra.mxu0 0.0
        %352 = vmatprep.subr.mxu0 0.0
        %353 = vmatpush1.msra.mxu0 0.0
        %354 = vmatprep.subr.mxu0 0.0
        %355 = vmatpush1.msra.mxu0 0.0
        %356 = vmatprep.subr.mxu0 0.0
        %357 = vmatpush1.msra.mxu0 0.0
        %358 = vmatprep.subr.mxu0 0.0
        %359 = vmatpush1.msra.mxu0 0.0
        %360 = vmatprep.subr.mxu0 0.0
        %361 = vmatpush1.msra.mxu0 0.0
        %362 = vmatprep.subr.mxu0 0.0
        %363 = vmatpush1.msra.mxu0 0.0
        %364 = vmatprep.subr.mxu0 0.0
        %365 = vmatpush1.msra.mxu0 0.0
        %366 = vmatprep.subr.mxu0 0.0
        %367 = vmatpush1.msra.mxu0 0.0
        %368 = vmatprep.subr.mxu0 0.0
        %369 = vmatpush1.msra.mxu0 0.0
        %370 = vmatprep.subr.mxu0 0.0
        %371 = vmatpush1.msra.mxu0 0.0
        %372 = vmatprep.subr.mxu0 0.0
        %373 = vmatpush1.msra.mxu0 0.0
        %374 = vmatprep.subr.mxu0 %v322
        %375 = vmatpush1.msra.mxu0 %v321
        %376 = vmatprep.subr.mxu0 %v318
        %377 = vmatpush1.msra.mxu0 %v317
        %378 = vmatprep.subr.mxu0 0.0
        %379 = vmatpush2.msra.mxu0 0.0
        %380 = vmatprep.subr.mxu0 0.0
        %381 = vmatpush2.msra.mxu0 0.0
        %382 = vmatprep.subr.mxu0 0.0
        %383 = vmatpush2.msra.mxu0 0.0
        %384 = vmatprep.subr.mxu0 0.0
        %385 = vmatpush2.msra.mxu0 0.0
        %386 = vmatprep.subr.mxu0 0.0
        %387 = vmatpush2.msra.mxu0 0.0
        %388 = vmatprep.subr.mxu0 0.0
        %389 = vmatpush2.msra.mxu0 0.0
        %390 = vmatprep.subr.mxu0 0.0
        %391 = vmatpush2.msra.mxu0 0.0
        %392 = vmatprep.subr.mxu0 0.0
        %393 = vmatpush2.msra.mxu0 0.0
        %394 = vmatprep.subr.mxu0 0.0
        %395 = vmatpush2.msra.mxu0 0.0
        %396 = vmatprep.subr.mxu0 0.0
        %397 = vmatpush2.msra.mxu0 0.0
        %398 = vmatprep.subr.mxu0 0.0
        %399 = vmatpush2.msra.mxu0 0.0
        %400 = vmatprep.subr.mxu0 0.0
        %401 = vmatpush2.msra.mxu0 0.0
        %402 = vmatprep.subr.mxu0 0.0
        %403 = vmatpush2.msra.mxu0 0.0
        %404 = vmatprep.subr.mxu0 0.0
        %405 = vmatpush2.msra.mxu0 0.0
        %406 = vmatprep.subr.mxu0 0.0
        %407 = vmatpush2.msra.mxu0 0.0
        %408 = vmatprep.subr.mxu0 0.0
        %409 = vmatpush2.msra.mxu0 0.0
        %410 = vmatprep.mubr.f32.mxu0 0.0
        %411 = vmatmul.mubr.f32.gmra.mxu0 %v338
        %v412 = vpop.f32.mrf.mxu0
        %v413 = vadd.f32 0.0, %v412
        %v414 = vpop.f32.mrf.mxu0
        %v415 = vadd.f32 0.0, %v414
        %416 = vmatprep.mubr.f32.mxu0 0.0
        %417 = vmatmul.mubr.f32.gmra.mxu0 %v340
        %v418 = vpop.f32.mrf.mxu0
        %v419 = vadd.f32 0.0, %v418
        %v420 = vpop.f32.mrf.mxu0
        %v421 = vadd.f32 0.0, %v420
        %422 = vmatprep.mubr.f32.mxu0 0.0
        %423 = vmatmul.mubr.f32.gmra.mxu0 %v342
        %v424 = vpop.f32.mrf.mxu0
        %v425 = vadd.f32 0.0, %v424
        %v426 = vpop.f32.mrf.mxu0
        %v427 = vadd.f32 0.0, %v426
        %428 = vmatprep.mubr.f32.mxu0 0.0
        %429 = vmatmul.mubr.f32.gmra.mxu0 %v344
        %v430 = vpop.f32.mrf.mxu0
        %v431 = vadd.f32 0.0, %v430
        %v432 = vpop.f32.mrf.mxu0
        %v433 = vadd.f32 0.0, %v432
        %434 = vdwg.mxu0
        %435 = vmatprep.subr.mxu0 0.0
        %436 = vmatpush1.msra.mxu0 0.0
        %437 = vmatprep.subr.mxu0 0.0
        %438 = vmatpush1.msra.mxu0 0.0
        %439 = vmatprep.subr.mxu0 0.0
        %440 = vmatpush1.msra.mxu0 0.0
        %441 = vmatprep.subr.mxu0 0.0
        %442 = vmatpush1.msra.mxu0 0.0
        %443 = vmatprep.subr.mxu0 0.0
        %444 = vmatpush1.msra.mxu0 0.0
        %445 = vmatprep.subr.mxu0 0.0
        %446 = vmatpush1.msra.mxu0 0.0
        %447 = vmatprep.subr.mxu0 0.0
        %448 = vmatpush1.msra.mxu0 0.0
        %449 = vmatprep.subr.mxu0 0.0
        %450 = vmatpush1.msra.mxu0 0.0
        %451 = vmatprep.subr.mxu0 0.0
        %452 = vmatpush1.msra.mxu0 0.0
        %453 = vmatprep.subr.mxu0 0.0
        %454 = vmatpush1.msra.mxu0 0.0
        %455 = vmatprep.subr.mxu0 0.0
        %456 = vmatpush1.msra.mxu0 0.0
        %457 = vmatprep.subr.mxu0 0.0
        %458 = vmatpush1.msra.mxu0 0.0
        %459 = vmatprep.subr.mxu0 0.0
        %460 = vmatpush1.msra.mxu0 0.0
        %461 = vmatprep.subr.mxu0 0.0
        %462 = vmatpush1.msra.mxu0 0.0
        %463 = vmatprep.subr.mxu0 %v324
        %464 = vmatpush1.msra.mxu0 %v323
        %465 = vmatprep.subr.mxu0 %v320
        %466 = vmatpush1.msra.mxu0 %v319
        %467 = vmatprep.subr.mxu0 0.0
        %468 = vmatpush2.msra.mxu0 0.0
        %469 = vmatprep.subr.mxu0 0.0
        %470 = vmatpush2.msra.mxu0 0.0
        %471 = vmatprep.subr.mxu0 0.0
        %472 = vmatpush2.msra.mxu0 0.0
        %473 = vmatprep.subr.mxu0 0.0
        %474 = vmatpush2.msra.mxu0 0.0
        %475 = vmatprep.subr.mxu0 0.0
        %476 = vmatpush2.msra.mxu0 0.0
        %477 = vmatprep.subr.mxu0 0.0
        %478 = vmatpush2.msra.mxu0 0.0
        %479 = vmatprep.subr.mxu0 0.0
        %480 = vmatpush2.msra.mxu0 0.0
        %481 = vmatprep.subr.mxu0 0.0
        %482 = vmatpush2.msra.mxu0 0.0
        %483 = vmatprep.subr.mxu0 0.0
        %484 = vmatpush2.msra.mxu0 0.0
        %485 = vmatprep.subr.mxu0 0.0
        %486 = vmatpush2.msra.mxu0 0.0
        %487 = vmatprep.subr.mxu0 0.0
        %488 = vmatpush2.msra.mxu0 0.0
        %489 = vmatprep.subr.mxu0 0.0
        %490 = vmatpush2.msra.mxu0 0.0
        %491 = vmatprep.subr.mxu0 0.0
        %492 = vmatpush2.msra.mxu0 0.0
        %493 = vmatprep.subr.mxu0 0.0
        %494 = vmatpush2.msra.mxu0 0.0
        %495 = vmatprep.subr.mxu0 0.0
        %496 = vmatpush2.msra.mxu0 0.0
        %497 = vmatprep.subr.mxu0 0.0
        %498 = vmatpush2.msra.mxu0 0.0
        %499 = vmatprep.mubr.f32.mxu0 0.0
        %500 = vmatmul.mubr.f32.gmra.mxu0 %v338
        %v501 = vpop.f32.mrf.mxu0
        %v502 = vadd.f32 0.0, %v501
        %v503 = vpop.f32.mrf.mxu0
        %v504 = vadd.f32 0.0, %v503
        %505 = vmatprep.mubr.f32.mxu0 0.0
        %506 = vmatmul.mubr.f32.gmra.mxu0 %v340
        %v507 = vpop.f32.mrf.mxu0
        %v508 = vadd.f32 0.0, %v507
        %v509 = vpop.f32.mrf.mxu0
        %v510 = vadd.f32 0.0, %v509
        %511 = vmatprep.mubr.f32.mxu0 0.0
        %512 = vmatmul.mubr.f32.gmra.mxu0 %v342
        %v513 = vpop.f32.mrf.mxu0
        %v514 = vadd.f32 0.0, %v513
        %v515 = vpop.f32.mrf.mxu0
        %v516 = vadd.f32 0.0, %v515
        %517 = vmatprep.mubr.f32.mxu0 0.0
        %518 = vmatmul.mubr.f32.gmra.mxu0 %v344
        %v519 = vpop.f32.mrf.mxu0
        %v520 = vadd.f32 0.0, %v519
        %v521 = vpop.f32.mrf.mxu0
        %v522 = vadd.f32 0.0, %v521
        %523 = vdwg.mxu0
        %v524 = vmax.f32 %v413, 0.0
        %v525 = vmax.f32 %v415, 0.0
        %v526 = vmax.f32 %v502, 0.0
        %v527 = vmax.f32 %v504, 0.0
        %v528 = vmax.f32 %v419, 0.0
        %v529 = vmax.f32 %v421, 0.0
        %v530 = vmax.f32 %v508, 0.0
        %v531 = vmax.f32 %v510, 0.0
        %v532 = vmax.f32 %v425, 0.0
        %v533 = vmax.f32 %v427, 0.0
        %v534 = vmax.f32 %v514, 0.0
        %v535 = vmax.f32 %v516, 0.0
        %v536 = vmax.f32 %v431, 0.0
        %v537 = vmax.f32 %v433, 0.0
        %v538 = vmax.f32 %v520, 0.0
        %v539 = vmax.f32 %v522, 0.0
        %540 = vset.pattern.permute.xlu0 0
        %541 = vperm.xlu0 %540, %v270
        %v542 = vpop.permute.xlu0 %541
        %544 = vset.pattern.permute.xlu0 0
        %545 = vperm.xlu0 %544, %v271
        %v546 = vpop.permute.xlu0 %545
        %548 = vset.pattern.permute.xlu0 0
        %549 = vperm.xlu0 %548, %v272
        %v550 = vpop.permute.xlu0 %549
        %552 = vset.pattern.permute.xlu0 0
        %553 = vperm.xlu0 %552, %v273
        %v554 = vpop.permute.xlu0 %553
        %556 = vrot.lane.b32.xlu0 %v270, 104
        %v557 = vpop.permute.xlu0 %556
        %558 = vrot.lane.b32.xlu0 %v271, 104
        %v559 = vpop.permute.xlu0 %558
        %560 = vrot.lane.b32.xlu0 %v272, 104
        %v561 = vpop.permute.xlu0 %560
        %562 = vrot.lane.b32.xlu0 %v273, 104
        %v563 = vpop.permute.xlu0 %562
        %vm564 = vcmask 261120
        %v565 = vsel %vm564, %v557, 0
        %v567 = vsel %vm564, %v559, 0
        %v569 = vsel %vm564, %v561, 0
        %v571 = vsel %vm564, %v563, 0
        %573 = vmatprep.subr.mxu0 0.0
        %574 = vmatpush1.msra.mxu0 0.0
        %575 = vmatprep.subr.mxu0 0.0
        %576 = vmatpush1.msra.mxu0 0.0
        %577 = vmatprep.subr.mxu0 0.0
        %578 = vmatpush1.msra.mxu0 0.0
        %579 = vmatprep.subr.mxu0 0.0
        %580 = vmatpush1.msra.mxu0 0.0
        %581 = vmatprep.subr.mxu0 0.0
        %582 = vmatpush1.msra.mxu0 0.0
        %583 = vmatprep.subr.mxu0 0.0
        %584 = vmatpush1.msra.mxu0 0.0
        %585 = vmatprep.subr.mxu0 0.0
        %586 = vmatpush1.msra.mxu0 0.0
        %587 = vmatprep.subr.mxu0 0.0
        %588 = vmatpush1.msra.mxu0 0.0
        %589 = vmatprep.subr.mxu0 0.0
        %590 = vmatpush1.msra.mxu0 0.0
        %591 = vmatprep.subr.mxu0 0.0
        %592 = vmatpush1.msra.mxu0 0.0
        %593 = vmatprep.subr.mxu0 0.0
        %594 = vmatpush1.msra.mxu0 0.0
        %595 = vmatprep.subr.mxu0 0.0
        %596 = vmatpush1.msra.mxu0 0.0
        %597 = vmatprep.subr.mxu0 %v537
        %598 = vmatpush1.msra.mxu0 %v536
        %599 = vmatprep.subr.mxu0 %v533
        %600 = vmatpush1.msra.mxu0 %v532
        %601 = vmatprep.subr.mxu0 %v529
        %602 = vmatpush1.msra.mxu0 %v528
        %603 = vmatprep.subr.mxu0 %v525
        %604 = vmatpush1.msra.mxu0 %v524
        %605 = vmatprep.subr.mxu0 0.0
        %606 = vmatpush2.msra.mxu0 0.0
        %607 = vmatprep.subr.mxu0 0.0
        %608 = vmatpush2.msra.mxu0 0.0
        %609 = vmatprep.subr.mxu0 0.0
        %610 = vmatpush2.msra.mxu0 0.0
        %611 = vmatprep.subr.mxu0 0.0
        %612 = vmatpush2.msra.mxu0 0.0
        %613 = vmatprep.subr.mxu0 0.0
        %614 = vmatpush2.msra.mxu0 0.0
        %615 = vmatprep.subr.mxu0 0.0
        %616 = vmatpush2.msra.mxu0 0.0
        %617 = vmatprep.subr.mxu0 0.0
        %618 = vmatpush2.msra.mxu0 0.0
        %619 = vmatprep.subr.mxu0 0.0
        %620 = vmatpush2.msra.mxu0 0.0
        %621 = vmatprep.subr.mxu0 0.0
        %622 = vmatpush2.msra.mxu0 0.0
        %623 = vmatprep.subr.mxu0 0.0
        %624 = vmatpush2.msra.mxu0 0.0
        %625 = vmatprep.subr.mxu0 0.0
        %626 = vmatpush2.msra.mxu0 0.0
        %627 = vmatprep.subr.mxu0 0.0
        %628 = vmatpush2.msra.mxu0 0.0
        %629 = vmatprep.subr.mxu0 0.0
        %630 = vmatpush2.msra.mxu0 0.0
        %631 = vmatprep.subr.mxu0 0.0
        %632 = vmatpush2.msra.mxu0 0.0
        %633 = vmatprep.subr.mxu0 0.0
        %634 = vmatpush2.msra.mxu0 0.0
        %635 = vmatprep.subr.mxu0 0.0
        %636 = vmatpush2.msra.mxu0 0.0
        %637 = vmatprep.mubr.f32.mxu0 0.0
        %638 = vmatmul.mubr.f32.gmra.mxu0 %v565
        %v639 = vpop.f32.mrf.mxu0
        %v640 = vadd.f32 %v542, %v639
        %v641 = vpop.f32.mrf.mxu0
        %v642 = vadd.f32 %v542, %v641
        %643 = vmatprep.mubr.f32.mxu0 0.0
        %644 = vmatmul.mubr.f32.gmra.mxu0 %v567
        %v645 = vpop.f32.mrf.mxu0
        %v646 = vadd.f32 %v546, %v645
        %v647 = vpop.f32.mrf.mxu0
        %v648 = vadd.f32 %v546, %v647
        %649 = vmatprep.mubr.f32.mxu0 0.0
        %650 = vmatmul.mubr.f32.gmra.mxu0 %v569
        %v651 = vpop.f32.mrf.mxu0
        %v652 = vadd.f32 %v550, %v651
        %v653 = vpop.f32.mrf.mxu0
        %v654 = vadd.f32 %v550, %v653
        %655 = vmatprep.mubr.f32.mxu0 0.0
        %656 = vmatmul.mubr.f32.gmra.mxu0 %v571
        %v657 = vpop.f32.mrf.mxu0
        %v658 = vadd.f32 %v554, %v657
        %v659 = vpop.f32.mrf.mxu0
        %v660 = vadd.f32 %v554, %v659
        %661 = vdwg.mxu0
        %662 = vmatprep.subr.mxu0 0.0
        %663 = vmatpush1.msra.mxu0 0.0
        %664 = vmatprep.subr.mxu0 0.0
        %665 = vmatpush1.msra.mxu0 0.0
        %666 = vmatprep.subr.mxu0 0.0
        %667 = vmatpush1.msra.mxu0 0.0
        %668 = vmatprep.subr.mxu0 0.0
        %669 = vmatpush1.msra.mxu0 0.0
        %670 = vmatprep.subr.mxu0 0.0
        %671 = vmatpush1.msra.mxu0 0.0
        %672 = vmatprep.subr.mxu0 0.0
        %673 = vmatpush1.msra.mxu0 0.0
        %674 = vmatprep.subr.mxu0 0.0
        %675 = vmatpush1.msra.mxu0 0.0
        %676 = vmatprep.subr.mxu0 0.0
        %677 = vmatpush1.msra.mxu0 0.0
        %678 = vmatprep.subr.mxu0 0.0
        %679 = vmatpush1.msra.mxu0 0.0
        %680 = vmatprep.subr.mxu0 0.0
        %681 = vmatpush1.msra.mxu0 0.0
        %682 = vmatprep.subr.mxu0 0.0
        %683 = vmatpush1.msra.mxu0 0.0
        %684 = vmatprep.subr.mxu0 0.0
        %685 = vmatpush1.msra.mxu0 0.0
        %686 = vmatprep.subr.mxu0 %v539
        %687 = vmatpush1.msra.mxu0 %v538
        %688 = vmatprep.subr.mxu0 %v535
        %689 = vmatpush1.msra.mxu0 %v534
        %690 = vmatprep.subr.mxu0 %v531
        %691 = vmatpush1.msra.mxu0 %v530
        %692 = vmatprep.subr.mxu0 %v527
        %693 = vmatpush1.msra.mxu0 %v526
        %694 = vmatprep.subr.mxu0 0.0
        %695 = vmatpush2.msra.mxu0 0.0
        %696 = vmatprep.subr.mxu0 0.0
        %697 = vmatpush2.msra.mxu0 0.0
        %698 = vmatprep.subr.mxu0 0.0
        %699 = vmatpush2.msra.mxu0 0.0
        %700 = vmatprep.subr.mxu0 0.0
        %701 = vmatpush2.msra.mxu0 0.0
        %702 = vmatprep.subr.mxu0 0.0
        %703 = vmatpush2.msra.mxu0 0.0
        %704 = vmatprep.subr.mxu0 0.0
        %705 = vmatpush2.msra.mxu0 0.0
        %706 = vmatprep.subr.mxu0 0.0
        %707 = vmatpush2.msra.mxu0 0.0
        %708 = vmatprep.subr.mxu0 0.0
        %709 = vmatpush2.msra.mxu0 0.0
        %710 = vmatprep.subr.mxu0 0.0
        %711 = vmatpush2.msra.mxu0 0.0
        %712 = vmatprep.subr.mxu0 0.0
        %713 = vmatpush2.msra.mxu0 0.0
        %714 = vmatprep.subr.mxu0 0.0
        %715 = vmatpush2.msra.mxu0 0.0
        %716 = vmatprep.subr.mxu0 0.0
        %717 = vmatpush2.msra.mxu0 0.0
        %718 = vmatprep.subr.mxu0 0.0
        %719 = vmatpush2.msra.mxu0 0.0
        %720 = vmatprep.subr.mxu0 0.0
        %721 = vmatpush2.msra.mxu0 0.0
        %722 = vmatprep.subr.mxu0 0.0
        %723 = vmatpush2.msra.mxu0 0.0
        %724 = vmatprep.subr.mxu0 0.0
        %725 = vmatpush2.msra.mxu0 0.0
        %726 = vmatprep.mubr.f32.mxu0 0.0
        %727 = vmatmul.mubr.f32.gmra.mxu0 %v565
        %v728 = vpop.f32.mrf.mxu0
        %v729 = vadd.f32 %v542, %v728
        %v730 = vpop.f32.mrf.mxu0
        %v731 = vadd.f32 %v542, %v730
        %732 = vmatprep.mubr.f32.mxu0 0.0
        %733 = vmatmul.mubr.f32.gmra.mxu0 %v567
        %v734 = vpop.f32.mrf.mxu0
        %v735 = vadd.f32 %v546, %v734
        %v736 = vpop.f32.mrf.mxu0
        %v737 = vadd.f32 %v546, %v736
        %738 = vmatprep.mubr.f32.mxu0 0.0
        %739 = vmatmul.mubr.f32.gmra.mxu0 %v569
        %v740 = vpop.f32.mrf.mxu0
        %v741 = vadd.f32 %v550, %v740
        %v742 = vpop.f32.mrf.mxu0
        %v743 = vadd.f32 %v550, %v742
        %744 = vmatprep.mubr.f32.mxu0 0.0
        %745 = vmatmul.mubr.f32.gmra.mxu0 %v571
        %v746 = vpop.f32.mrf.mxu0
        %v747 = vadd.f32 %v554, %v746
        %v748 = vpop.f32.mrf.mxu0
        %v749 = vadd.f32 %v554, %v748
        %750 = vdwg.mxu0
        %v751 = vmax.f32 %v640, 0.0
        %v752 = vmax.f32 %v642, 0.0
        %v753 = vmax.f32 %v729, 0.0
        %v754 = vmax.f32 %v731, 0.0
        %v755 = vmax.f32 %v646, 0.0
        %v756 = vmax.f32 %v648, 0.0
        %v757 = vmax.f32 %v735, 0.0
        %v758 = vmax.f32 %v737, 0.0
        %v759 = vmax.f32 %v652, 0.0
        %v760 = vmax.f32 %v654, 0.0
        %v761 = vmax.f32 %v741, 0.0
        %v762 = vmax.f32 %v743, 0.0
        %v763 = vmax.f32 %v658, 0.0
        %v764 = vmax.f32 %v660, 0.0
        %v765 = vmax.f32 %v747, 0.0
        %v766 = vmax.f32 %v749, 0.0
        %767 = vset.pattern.permute.xlu0 1
        %768 = vperm.xlu0 %767, %v270
        %v769 = vpop.permute.xlu0 %768
        %771 = vset.pattern.permute.xlu0 1
        %772 = vperm.xlu0 %771, %v271
        %v773 = vpop.permute.xlu0 %772
        %775 = vset.pattern.permute.xlu0 1
        %776 = vperm.xlu0 %775, %v272
        %v777 = vpop.permute.xlu0 %776
        %779 = vset.pattern.permute.xlu0 1
        %780 = vperm.xlu0 %779, %v273
        %v781 = vpop.permute.xlu0 %780
        %v783 = vmul.f32 %v751, %v769
        %v784 = vmul.f32 %v752, %v769
        %v785 = vmul.f32 %v753, %v769
        %v786 = vmul.f32 %v754, %v769
        %v787 = vmul.f32 %v755, %v773
        %v788 = vmul.f32 %v756, %v773
        %v789 = vmul.f32 %v757, %v773
        %v790 = vmul.f32 %v758, %v773
        %v791 = vmul.f32 %v759, %v777
        %v792 = vmul.f32 %v760, %v777
        %v793 = vmul.f32 %v761, %v777
        %v794 = vmul.f32 %v762, %v777
        %v795 = vmul.f32 %v763, %v781
        %v796 = vmul.f32 %v764, %v781
        %v797 = vmul.f32 %v765, %v781
        %v798 = vmul.f32 %v766, %v781
        %v799 = vadd.f32 %v783, %v787
        %v800 = vadd.f32 %v799, %v791
        %v801 = vadd.f32 %v800, %v795
        %v802 = vrot.slane %v801, 4
        %v803 = vadd.f32 %v801, %v802
        %v804 = vrot.slane %v803, 2
        %v805 = vadd.f32 %v803, %v804
        %v806 = vrot.slane %v805, 1
        %v807 = vadd.f32 %v805, %v806
        %v808 = vadd.f32 %v784, %v788
        %v809 = vadd.f32 %v808, %v792
        %v810 = vadd.f32 %v809, %v796
        %v811 = vrot.slane %v810, 4
        %v812 = vadd.f32 %v810, %v811
        %v813 = vrot.slane %v812, 2
        %v814 = vadd.f32 %v812, %v813
        %v815 = vrot.slane %v814, 1
        %v816 = vadd.f32 %v814, %v815
        %v817 = vadd.f32 %v785, %v789
        %v818 = vadd.f32 %v817, %v793
        %v819 = vadd.f32 %v818, %v797
        %v820 = vrot.slane %v819, 4
        %v821 = vadd.f32 %v819, %v820
        %v822 = vrot.slane %v821, 2
        %v823 = vadd.f32 %v821, %v822
        %v824 = vrot.slane %v823, 1
        %v825 = vadd.f32 %v823, %v824
        %v826 = vadd.f32 %v786, %v790
        %v827 = vadd.f32 %v826, %v794
        %v828 = vadd.f32 %v827, %v798
        %v829 = vrot.slane %v828, 4
        %v830 = vadd.f32 %v828, %v829
        %v831 = vrot.slane %v830, 2
        %v832 = vadd.f32 %v830, %v831
        %v833 = vrot.slane %v832, 1
        %v834 = vadd.f32 %v832, %v833
        %s835 = sld [smem:[#allocation3]]
        %v836 = vstv %s835
        %v837 = vadd.f32 %v807, %v836
        %v838 = vadd.f32 %v816, %v836
        %v839 = vadd.f32 %v825, %v836
        %v840 = vadd.f32 %v834, %v836
        %v845 = vcombine.low %v837, %v838
        %v846 = vcombine.low %v839, %v840
        %v848 = vunpack.c.l.s4 1966171168
        %v849 = vunpack.c.0.s8 %v848
        %v850 = vlaneseq
        %v851 = vshrl.u32 %v850, 7
        %v852 = vsub.s32 %v849, %v851
        %v853 = vrot.slane %v845, %v852
        %v855 = vunpack.c.l.s4 1966171168
        %v856 = vunpack.c.0.s8 %v855
        %v857 = vlaneseq
        %v858 = vshrl.u32 %v857, 7
        %v859 = vsub.s32 %v856, %v858
        %v860 = vrot.slane %v846, %v859
        %v861 = vcombine.low %v853, %v860
        %v863 = vunpack.c.l.s4 1966171168
        %v864 = vunpack.c.0.s8 %v863
        %v865 = vlaneseq
        %v866 = vshrl.u32 %v865, 7
        %v867 = vsub.s32 %v864, %v866
        %v868 = vrot.slane %v861, %v867
        %v870 = vlaneseq
        %vm871 = vcmp.ge.s32.totalorder %v870, 0
        %vm872 = vcmp.lt.s32.totalorder %v870, 512
        %vm873 = vmand %vm871, %vm872
        %874 = vst.msk [vmem:[%s266] sm:$0xf] %vm873, %v868
        %s875 = sand.u32 %s127, 1
        %s876 = scalar_lea.sflag [#allocation6], %s875
        %s877 = sand.u32 %s127, 1
        %s878 = smul.addr %s877, 4
        %s879 = scalar_lea.vmem [#allocation10], %s878
        // Predicated region
        $region49: #{tpu_custom_call.1} parent=35 // pred_check
          %p880 = pneg %p137
        $region50: #{tpu_custom_call.1} parent=35 // pred_check_branch
          %882 = sbr.rel (%p880) target = $region52
        $region51: #{tpu_custom_call.1} parent=35 // pred_region
          %s883 = smul.u32 4, %s25
          %s885 = ssub.s32 64, 64
          %886 = vsyncadd %s876, %s885
          %s887 = smul.addr %s883, 16
          %s888 = scalar_lea.hbm %s4, %s887
          %s890 = sshll.u32 %s879, 4
          %s891 = int_to_ptr.vmem [resolvable:$true] %s890
          %893 = dma.vmem_to_hbm [thread:$0]  %s891, 64, %s888, %s876
        $region52: #{tpu_custom_call.1} parent=35 // pred_fallthru
          _
      $region36: #{tpu_custom_call.1} parent=5 // pred_fallthru
        _
      %p894 = scmp.le.s32.totalorder 2, %s20
      // Predicated region
      $region53: #{tpu_custom_call.1} parent=5 // pred_check
        %p895 = pneg %p894
      $region54: #{tpu_custom_call.1} parent=5 // pred_check_branch
        %897 = sbr.rel (%p895) target = $region56
      $region55: #{tpu_custom_call.1} parent=5 // pred_region
        %s898 = ssub.s32 %s20, 2
        // Predicated region
        $region57: #{tpu_custom_call.1} parent=55 // pred_check
          %p899 = pneg %p143
        $region58: #{tpu_custom_call.1} parent=55 // pred_check_branch
          %901 = sbr.rel (%p899) target = $region60
        $region59: #{tpu_custom_call.1} parent=55 // pred_region
          %s902 = sand.u32 %s128, 1
          %s903 = scalar_lea.sflag [#allocation6], %s902
          %s904 = sand.u32 %s128, 1
          %s905 = smul.addr %s904, 4
          %s906 = scalar_lea.vmem [#allocation10], %s905
          %907 = dma.done %s903, 64
        $region60: #{tpu_custom_call.1} parent=55 // pred_fallthru
          _
      $region56: #{tpu_custom_call.1} parent=5 // pred_fallthru
        _
    $region6: #{tpu_custom_call.1} parent=1 // loop_footer
      %s24 = sadd.s32 1, %s20
    $region7: #{tpu_custom_call.1} parent=1 // loop_footer_branch
      %19 = sbr.rel target = $region3
    $region8: #{tpu_custom_call.1} parent=1 // loop_exit
      _
    %908 = vsyncpa [#allocation5], 1
    %s909 = scalar_lea.sflag [#allocation5], 1
    %910 = vsyncpa %s909, 1
    %911 = vsyncpa [#allocation8], 1
    %s912 = scalar_lea.sflag [#allocation8], 1
    %913 = vsyncpa %s912, 1
    %914 = vsyncpa [#allocation6], 1
    %s915 = scalar_lea.sflag [#allocation6], 1
    %916 = vsyncpa %s915, 1

</llo_original>
